<compile_context>
chip_gen: v5e
topology: v5e:2x2
jax: 0.10.0
libtpu: 0.0.40
codegen_flags: <defaults>
</compile_context>

<pallas_src>
import functools

import jax
import jax.numpy as jnp
import numpy as np
from jax.experimental import pallas as pl
from jax.experimental.pallas import tpu as pltpu

KERNEL_SIZE = 3
GROUPS = KERNEL_SIZE ** 2  # ShiftConv forces groups = kernel_size**2


def _shiftconv_kernel(x_ref, w_ref, o_ref, *, m_out, row_stride):
    # x_ref : (1, in_c_used, L)             flattened spatially-padded NCHW image
    # w_ref : (GROUPS, c_total, in_c_used)  per-tap folded weights
    # o_ref : (1, c_total, m_out)           m_out = H*(W+2) flat output columns
    x = x_ref[0]                                        # (in_c_used, L)
    acc = None
    for g in range(GROUPS):                             # unrolled: 9 static taps
        i, j = g // KERNEL_SIZE, g % KERNEL_SIZE        # indices_of_on_pixel order
        d = i * row_stride + j                          # static lane offset of tap g
        contrib = jnp.dot(w_ref[g], x[:, d:d + m_out],
                          preferred_element_type=jnp.float32)
        acc = contrib if acc is None else acc + contrib
    o_ref[0] = acc.astype(o_ref.dtype)


def shift_conv(x_nchw, wp, *, in_channels, out_channels):
    """x_nchw: (N, in_channels, H, W); wp: (c_total, c_total) pointwise weight [out, in].

    Returns (N, c_total, H, W) in NCHW, c_total = out_channels (like the PyTorch module).
    """
    N, _, H, W = x_nchw.shape
    in_c_used = in_channels - in_channels % GROUPS
    out_c_used = out_channels - out_channels % GROUPS
    missing = out_channels % GROUPS
    if in_c_used == 0 or out_c_used == 0:
        raise ValueError("ShiftConv needs in_channels >= 9 and out_channels >= 9")
    in_per_group = in_c_used // GROUPS
    cpg = out_c_used // GROUPS
    c_total = out_c_used + missing

    w_pad = W + 2                      # row stride of the padded image
    m_out = H * w_pad                  # flat output columns per image (incl. 2 halo cols)
    L = (H + 3) * w_pad                # 1 extra bottom row keeps halo-column taps in bounds

    # ---- host-side weight folding (tiny, done once) -------------------------
    # Effective pointwise weight per shift group:
    #   w_eff[o, g] = sum over that output group's wp columns,
    # with the replicated "missing" channels folded into the centre group.
    w_eff = wp[:, :out_c_used].reshape(c_total, GROUPS, cpg).sum(-1)   # (c_total, GROUPS)
    if missing > 0:
        centre_group = (out_c_used // 2) // cpg
        w_eff = w_eff.at[:, centre_group].add(wp[:, out_c_used:].sum(-1))
    # Per-tap combined weight: nonzero only on that tap's input-channel group.
    grp_of_in = jnp.arange(in_c_used) // in_per_group                  # (in_c_used,)
    sel = (grp_of_in[None, :] == jnp.arange(GROUPS)[:, None]).astype(wp.dtype)
    w_taps = w_eff.T[:, :, None] * sel[:, None, :]      # (GROUPS, c_total, in_c_used)

    # ---- input prep: drop unused channels, pad spatially, flatten (no transpose)
    xpad = jnp.pad(x_nchw[:, :in_c_used], ((0, 0), (0, 0), (1, 2), (1, 1)))
    x_flat = xpad.reshape(N, in_c_used, L)

    kernel = functools.partial(_shiftconv_kernel, m_out=m_out, row_stride=w_pad)

    out_flat = pl.pallas_call(
        kernel,
        out_shape=jax.ShapeDtypeStruct((N, c_total, m_out), x_nchw.dtype),
        grid_spec=pltpu.PrefetchScalarGridSpec(
            num_scalar_prefetch=0,
            grid=(N,),
            in_specs=[
                pl.BlockSpec((1, in_c_used, L), lambda n: (n, 0, 0)),
                pl.BlockSpec((GROUPS, c_total, in_c_used), lambda n: (0, 0, 0)),
            ],
            out_specs=pl.BlockSpec((1, c_total, m_out), lambda n: (n, 0, 0)),
        ),
        compiler_params=pltpu.CompilerParams(
            dimension_semantics=("parallel",)),
    )(x_flat, w_taps)

    # Drop the 2 halo columns; result is already NCHW (no output transpose).
    return out_flat.reshape(N, c_total, H, w_pad)[..., :W]


def reference(x_nchw, wp, *, in_channels, out_channels):
    """Pure-JAX (lax.conv) reference reproducing the PyTorch forward."""
    in_c_used = in_channels - in_channels % GROUPS
    out_c_used = out_channels - out_channels % GROUPS
    missing = out_channels % GROUPS
    in_per_group = in_c_used // GROUPS
    cpg = out_c_used // GROUPS

    w = np.zeros((out_c_used, in_per_group, KERNEL_SIZE, KERNEL_SIZE), np.float32)
    for g in range(GROUPS):
        i, j = g // KERNEL_SIZE, g % KERNEL_SIZE
        w[g * cpg:(g + 1) * cpg, :, i, j] = 1.0

    out = jax.lax.conv_general_dilated(
        x_nchw[:, :in_c_used], jnp.asarray(w), (1, 1), ((1, 1), (1, 1)),
        feature_group_count=GROUPS,
        dimension_numbers=("NCHW", "OIHW", "NCHW"))
    if missing > 0:
        centre = out[:, out_c_used // 2:out_c_used // 2 + 1]
        out = jnp.concatenate([out] + [centre] * missing, axis=1)
    return jax.lax.conv_general_dilated(
        out, wp[:, :, None, None], (1, 1), "VALID",
        dimension_numbers=("NCHW", "OIHW", "NCHW"))


if __name__ == "__main__":
    in_channels, out_channels = 18, 20    # in_c_used=18, out_c_used=18, missing=2
    N, H, W = 2, 16, 16
    c_total = out_channels

    key = jax.random.PRNGKey(0)
    kx, kw = jax.random.split(key)
    x = jax.random.normal(kx, (N, in_channels, H, W), dtype=jnp.float32)
    # Deterministic pointwise-conv weight (PyTorch init is random; seeded here).
    wp = jax.random.normal(kw, (c_total, c_total), dtype=jnp.float32) / np.sqrt(c_total)

    out = shift_conv(x, wp, in_channels=in_channels, out_channels=out_channels)
    out = jax.block_until_ready(out)

    ref = reference(x, wp, in_channels=in_channels, out_channels=out_channels)
    assert out.shape == (N, out_channels, H, W)
    np.testing.assert_allclose(np.asarray(out), np.asarray(ref), rtol=1e-4, atol=1e-4)
    print("KERNEL_OK")
</pallas_src>

<mosaic_0001>
module attributes {stable_mosaic.version = 11 : i64} {
  func.func @_shiftconv_kernel(%arg0: i32, %arg1: memref<1x18x342xf32, #tpu.memory_space<vmem>>, %arg2: memref<9x20x18xf32, #tpu.memory_space<vmem>>, %arg3: memref<1x20x288xf32, #tpu.memory_space<vmem>>) attributes {dimension_semantics = [#tpu.dimension_semantics<parallel>], iteration_bounds = array<i64: 2>, scalar_prefetch = 0 : i64, scratch_operands = 0 : i64, tpu.core_type = #tpu.core_type<tc>, window_params = [{transform_indices = @transform_0, window_bounds = array<i64: 1, 18, 342>}, {pipeline_mode = #tpu.pipeline_mode<synchronous>, transform_indices = @transform_1, window_bounds = array<i64: 9, 20, 18>}, {transform_indices = @transform_2, window_bounds = array<i64: 1, 20, 288>}]} {
    %c0 = arith.constant 0 : index
    %c0_0 = arith.constant 0 : index
    %c0_1 = arith.constant 0 : index
    %0 = vector.load %arg1[%c0, %c0_0, %c0_1] : memref<1x18x342xf32, #tpu.memory_space<vmem>>, vector<1x18x342xf32>
    %1 = vector.shape_cast %0 : vector<1x18x342xf32> to vector<18x342xf32>
    %c0_2 = arith.constant 0 : index
    %c0_3 = arith.constant 0 : index
    %c0_4 = arith.constant 0 : index
    %2 = vector.load %arg2[%c0_2, %c0_3, %c0_4] : memref<9x20x18xf32, #tpu.memory_space<vmem>>, vector<1x20x18xf32>
    %3 = vector.shape_cast %2 : vector<1x20x18xf32> to vector<20x18xf32>
    %4 = vector.extract_strided_slice %1 {offsets = [0, 0], sizes = [18, 288], strides = [1, 1]} : vector<18x342xf32> to vector<18x288xf32>
    %cst = arith.constant dense<0.000000e+00> : vector<20x288xf32>
    %5 = tpu.matmul %3, %4, %cst {dimension_numbers = #tpu.dot_dimension_numbers<[1], [0], [0], [1], [0, 0, 1, 1], [], []>} : vector<20x18xf32>, vector<18x288xf32>, vector<20x288xf32> -> vector<20x288xf32>
    %c1 = arith.constant 1 : index
    %c0_5 = arith.constant 0 : index
    %c0_6 = arith.constant 0 : index
    %6 = vector.load %arg2[%c1, %c0_5, %c0_6] : memref<9x20x18xf32, #tpu.memory_space<vmem>>, vector<1x20x18xf32>
    %7 = vector.shape_cast %6 : vector<1x20x18xf32> to vector<20x18xf32>
    %8 = vector.extract_strided_slice %1 {offsets = [0, 1], sizes = [18, 288], strides = [1, 1]} : vector<18x342xf32> to vector<18x288xf32>
    %cst_7 = arith.constant dense<0.000000e+00> : vector<20x288xf32>
    %9 = tpu.matmul %7, %8, %cst_7 {dimension_numbers = #tpu.dot_dimension_numbers<[1], [0], [0], [1], [0, 0, 1, 1], [], []>} : vector<20x18xf32>, vector<18x288xf32>, vector<20x288xf32> -> vector<20x288xf32>
    %10 = arith.addf %5, %9 : vector<20x288xf32>
    %c2 = arith.constant 2 : index
    %c0_8 = arith.constant 0 : index
    %c0_9 = arith.constant 0 : index
    %11 = vector.load %arg2[%c2, %c0_8, %c0_9] : memref<9x20x18xf32, #tpu.memory_space<vmem>>, vector<1x20x18xf32>
    %12 = vector.shape_cast %11 : vector<1x20x18xf32> to vector<20x18xf32>
    %13 = vector.extract_strided_slice %1 {offsets = [0, 2], sizes = [18, 288], strides = [1, 1]} : vector<18x342xf32> to vector<18x288xf32>
    %cst_10 = arith.constant dense<0.000000e+00> : vector<20x288xf32>
    %14 = tpu.matmul %12, %13, %cst_10 {dimension_numbers = #tpu.dot_dimension_numbers<[1], [0], [0], [1], [0, 0, 1, 1], [], []>} : vector<20x18xf32>, vector<18x288xf32>, vector<20x288xf32> -> vector<20x288xf32>
    %15 = arith.addf %10, %14 : vector<20x288xf32>
    %c3 = arith.constant 3 : index
    %c0_11 = arith.constant 0 : index
    %c0_12 = arith.constant 0 : index
    %16 = vector.load %arg2[%c3, %c0_11, %c0_12] : memref<9x20x18xf32, #tpu.memory_space<vmem>>, vector<1x20x18xf32>
    %17 = vector.shape_cast %16 : vector<1x20x18xf32> to vector<20x18xf32>
    %18 = vector.extract_strided_slice %1 {offsets = [0, 18], sizes = [18, 288], strides = [1, 1]} : vector<18x342xf32> to vector<18x288xf32>
    %cst_13 = arith.constant dense<0.000000e+00> : vector<20x288xf32>
    %19 = tpu.matmul %17, %18, %cst_13 {dimension_numbers = #tpu.dot_dimension_numbers<[1], [0], [0], [1], [0, 0, 1, 1], [], []>} : vector<20x18xf32>, vector<18x288xf32>, vector<20x288xf32> -> vector<20x288xf32>
    %20 = arith.addf %15, %19 : vector<20x288xf32>
    %c4 = arith.constant 4 : index
    %c0_14 = arith.constant 0 : index
    %c0_15 = arith.constant 0 : index
    %21 = vector.load %arg2[%c4, %c0_14, %c0_15] : memref<9x20x18xf32, #tpu.memory_space<vmem>>, vector<1x20x18xf32>
    %22 = vector.shape_cast %21 : vector<1x20x18xf32> to vector<20x18xf32>
    %23 = vector.extract_strided_slice %1 {offsets = [0, 19], sizes = [18, 288], strides = [1, 1]} : vector<18x342xf32> to vector<18x288xf32>
    %cst_16 = arith.constant dense<0.000000e+00> : vector<20x288xf32>
    %24 = tpu.matmul %22, %23, %cst_16 {dimension_numbers = #tpu.dot_dimension_numbers<[1], [0], [0], [1], [0, 0, 1, 1], [], []>} : vector<20x18xf32>, vector<18x288xf32>, vector<20x288xf32> -> vector<20x288xf32>
    %25 = arith.addf %20, %24 : vector<20x288xf32>
    %c5 = arith.constant 5 : index
    %c0_17 = arith.constant 0 : index
    %c0_18 = arith.constant 0 : index
    %26 = vector.load %arg2[%c5, %c0_17, %c0_18] : memref<9x20x18xf32, #tpu.memory_space<vmem>>, vector<1x20x18xf32>
    %27 = vector.shape_cast %26 : vector<1x20x18xf32> to vector<20x18xf32>
    %28 = vector.extract_strided_slice %1 {offsets = [0, 20], sizes = [18, 288], strides = [1, 1]} : vector<18x342xf32> to vector<18x288xf32>
    %cst_19 = arith.constant dense<0.000000e+00> : vector<20x288xf32>
    %29 = tpu.matmul %27, %28, %cst_19 {dimension_numbers = #tpu.dot_dimension_numbers<[1], [0], [0], [1], [0, 0, 1, 1], [], []>} : vector<20x18xf32>, vector<18x288xf32>, vector<20x288xf32> -> vector<20x288xf32>
    %30 = arith.addf %25, %29 : vector<20x288xf32>
    %c6 = arith.constant 6 : index
    %c0_20 = arith.constant 0 : index
    %c0_21 = arith.constant 0 : index
    %31 = vector.load %arg2[%c6, %c0_20, %c0_21] : memref<9x20x18xf32, #tpu.memory_space<vmem>>, vector<1x20x18xf32>
    %32 = vector.shape_cast %31 : vector<1x20x18xf32> to vector<20x18xf32>
    %33 = vector.extract_strided_slice %1 {offsets = [0, 36], sizes = [18, 288], strides = [1, 1]} : vector<18x342xf32> to vector<18x288xf32>
    %cst_22 = arith.constant dense<0.000000e+00> : vector<20x288xf32>
    %34 = tpu.matmul %32, %33, %cst_22 {dimension_numbers = #tpu.dot_dimension_numbers<[1], [0], [0], [1], [0, 0, 1, 1], [], []>} : vector<20x18xf32>, vector<18x288xf32>, vector<20x288xf32> -> vector<20x288xf32>
    %35 = arith.addf %30, %34 : vector<20x288xf32>
    %c7 = arith.constant 7 : index
    %c0_23 = arith.constant 0 : index
    %c0_24 = arith.constant 0 : index
    %36 = vector.load %arg2[%c7, %c0_23, %c0_24] : memref<9x20x18xf32, #tpu.memory_space<vmem>>, vector<1x20x18xf32>
    %37 = vector.shape_cast %36 : vector<1x20x18xf32> to vector<20x18xf32>
    %38 = vector.extract_strided_slice %1 {offsets = [0, 37], sizes = [18, 288], strides = [1, 1]} : vector<18x342xf32> to vector<18x288xf32>
    %cst_25 = arith.constant dense<0.000000e+00> : vector<20x288xf32>
    %39 = tpu.matmul %37, %38, %cst_25 {dimension_numbers = #tpu.dot_dimension_numbers<[1], [0], [0], [1], [0, 0, 1, 1], [], []>} : vector<20x18xf32>, vector<18x288xf32>, vector<20x288xf32> -> vector<20x288xf32>
    %40 = arith.addf %35, %39 : vector<20x288xf32>
    %c8 = arith.constant 8 : index
    %c0_26 = arith.constant 0 : index
    %c0_27 = arith.constant 0 : index
    %41 = vector.load %arg2[%c8, %c0_26, %c0_27] : memref<9x20x18xf32, #tpu.memory_space<vmem>>, vector<1x20x18xf32>
    %42 = vector.shape_cast %41 : vector<1x20x18xf32> to vector<20x18xf32>
    %43 = vector.extract_strided_slice %1 {offsets = [0, 38], sizes = [18, 288], strides = [1, 1]} : vector<18x342xf32> to vector<18x288xf32>
    %cst_28 = arith.constant dense<0.000000e+00> : vector<20x288xf32>
    %44 = tpu.matmul %42, %43, %cst_28 {dimension_numbers = #tpu.dot_dimension_numbers<[1], [0], [0], [1], [0, 0, 1, 1], [], []>} : vector<20x18xf32>, vector<18x288xf32>, vector<20x288xf32> -> vector<20x288xf32>
    %45 = arith.addf %40, %44 : vector<20x288xf32>
    %c0_29 = arith.constant 0 : index
    %c0_30 = arith.constant 0 : index
    %c0_31 = arith.constant 0 : index
    %46 = vector.load %arg3[%c0_29, %c0_30, %c0_31] : memref<1x20x288xf32, #tpu.memory_space<vmem>>, vector<1x20x288xf32>
    %47 = vector.shape_cast %46 : vector<1x20x288xf32> to vector<20x288xf32>
    %48 = vector.shape_cast %45 : vector<20x288xf32> to vector<1x20x288xf32>
    tpu.vector_store %arg3[%c0_29, %c0_30, %c0_31], %48 {strides = array<i32>} : memref<1x20x288xf32, #tpu.memory_space<vmem>>, vector<1x20x288xf32>,
    return
  }
  func.func @transform_0(%arg0: i32) -> (i32, i32, i32) {
    %c0_i32 = arith.constant 0 : i32
    %c0_i32_0 = arith.constant 0 : i32
    %c0_i32_1 = arith.constant 0 : i32
    return %arg0, %c0_i32, %c0_i32_0 : i32, i32, i32
  }
  func.func @transform_1(%arg0: i32) -> (i32, i32, i32) {
    %c0_i32 = arith.constant 0 : i32
    %c0_i32_0 = arith.constant 0 : i32
    %c0_i32_1 = arith.constant 0 : i32
    %c0_i32_2 = arith.constant 0 : i32
    return %c0_i32, %c0_i32_0, %c0_i32_1 : i32, i32, i32
  }
  func.func @transform_2(%arg0: i32) -> (i32, i32, i32) {
    %c0_i32 = arith.constant 0 : i32
    %c0_i32_0 = arith.constant 0 : i32
    %c0_i32_1 = arith.constant 0 : i32
    return %arg0, %c0_i32, %c0_i32_0 : i32, i32, i32
  }
}

</mosaic_0001>

<llo_original>
// kernel: tpu_custom_call.1
$region0: #{tpu_custom_call.1}
  #allocation0 [shape = 'u32[]', space=smem, size = 0x4, offset = 0x4, fixed_abs, tag = 'smem constant byte address 0x4 - core index']
  #allocation1 [shape = 'u32[72,128]{1,0:T(1,128)}', space=vmem, size = 0x9000, scoped, tag = 'internal scratch']
  %s0 = inlined_call_operand.vmem [shape: f32[2,18,342], index: 0, kind: input, shape index: {}]
  %s1 = inlined_call_operand.vmem [shape: f32[9,20,18], index: 1, kind: input, shape index: {}]
  %s2 = inlined_call_operand.vmem [shape: f32[2,20,288], index: 2, kind: output, shape index: {}]
  %s3 = sld [smem:[#allocation0]]
  $region41: #{tpu_custom_call.1} parent=0
    _
  %s5 = ssub.s32 1, %s3
  %s6 = scalar_select 0, %s5, %s3
  loop: start=0, step=1, limit=4
  $region2: #{tpu_custom_call.1} parent=0 // loop_pre_header
    _
  $region3: #{tpu_custom_call.1} parent=0 // loop_header
    %s8 = sphi 0, %s12
    %p9 = scmp.ge.s32.totalorder %s8, 4
    %s18 = sphi 0, %s20
    %s21 = sphi 0, %s18
    %s22 = sphi 0, %s21
    %s38 = sphi 0, %s22
    %s42 = sphi 0, %s42
    %s44 = sphi 0, %s42
    %s45 = sphi 0, %s44
    %s59 = sphi 0, %s45
    %s65 = sphi 0, %s67
    %s68 = sphi 0, %s65
    %s69 = sphi 0, %s68
    %s85 = sphi 0, %s69
  $region4: #{tpu_custom_call.1} parent=0 // loop_header_branch
    %11 = sbr.rel (%p9) target = $region8
  $region5: #{tpu_custom_call.1} parent=0 // loop_body
    %s13 = ssub.s32 %s8, 1
    %s14 = ssub.s32 %s8, 2
    %s15 = sadd.s32 %s8, 1
    %s16 = ssub.s32 %s8, %s15
    %p17 = scmp.eq.s32.totalorder %s16, 0
    %s19 = sadd.s32 %s18, 1
    %s20 = scalar_select %p17, %s18, %s19
    %p23 = pneg %p17
    %p24 = scmp.eq.s32.totalorder %s8, 1
    %p25 = por %p23, %p24
    %p26 = scmp.ne.s32.totalorder %s18, %s21
    %p27 = scmp.eq.s32.totalorder %s8, 0
    %p28 = por %p26, %p27
    %p29 = scmp.ne.s32.totalorder %s18, %s21
    %p30 = scmp.eq.s32.totalorder %s13, 1
    %p31 = por %p29, %p30
    %p32 = scmp.ne.s32.totalorder %s21, %s22
    %p33 = scmp.eq.s32.totalorder %s13, 0
    %p34 = por %p32, %p33
    %p35 = scmp.ne.s32.totalorder %s21, %s22
    %p36 = scmp.eq.s32.totalorder %s14, 1
    %p37 = por %p35, %p36
    %p39 = scmp.ne.s32.totalorder %s22, %s38
    %p40 = scmp.eq.s32.totalorder %s14, 0
    %p41 = por %p39, %p40
    %s43 = sadd.s32 %s42, 1
    %p46 = scmp.eq.s32.totalorder %s8, 1
    %p47 = scmp.ne.s32.totalorder %s42, %s44
    %p48 = scmp.eq.s32.totalorder %s8, 0
    %p49 = por %p47, %p48
    %p50 = scmp.ne.s32.totalorder %s42, %s44
    %p51 = scmp.eq.s32.totalorder %s13, 1
    %p52 = por %p50, %p51
    %p53 = scmp.ne.s32.totalorder %s44, %s45
    %p54 = scmp.eq.s32.totalorder %s13, 0
    %p55 = por %p53, %p54
    %p56 = scmp.ne.s32.totalorder %s44, %s45
    %p57 = scmp.eq.s32.totalorder %s14, 1
    %p58 = por %p56, %p57
    %p60 = scmp.ne.s32.totalorder %s45, %s59
    %p61 = scmp.eq.s32.totalorder %s14, 0
    %p62 = por %p60, %p61
    %s63 = ssub.s32 %s8, %s15
    %p64 = scmp.eq.s32.totalorder %s63, 0
    %s66 = sadd.s32 %s65, 1
    %s67 = scalar_select %p64, %s65, %s66
    %p70 = pneg %p64
    %p71 = scmp.eq.s32.totalorder %s8, 1
    %p72 = por %p70, %p71
    %p73 = scmp.ne.s32.totalorder %s65, %s68
    %p74 = scmp.eq.s32.totalorder %s8, 0
    %p75 = por %p73, %p74
    %p76 = scmp.ne.s32.totalorder %s65, %s68
    %p77 = scmp.eq.s32.totalorder %s13, 1
    %p78 = por %p76, %p77
    %p79 = scmp.ne.s32.totalorder %s68, %s69
    %p80 = scmp.eq.s32.totalorder %s13, 0
    %p81 = por %p79, %p80
    %p82 = scmp.ne.s32.totalorder %s68, %s69
    %p83 = scmp.eq.s32.totalorder %s14, 1
    %p84 = por %p82, %p83
    %p86 = scmp.ne.s32.totalorder %s69, %s85
    %p87 = scmp.eq.s32.totalorder %s14, 0
    %p88 = por %p86, %p87
    %p89 = scmp.le.s32.totalorder 1, %s8
    %p90 = scmp.lt.s32.totalorder %s8, 3
    %p91 = pnand %p89, %p90
    %p92 = pneg %p91
    // Predicated region
    $region9: #{tpu_custom_call.1} parent=5 // pred_check
      _
    $region10: #{tpu_custom_call.1} parent=5 // pred_check_branch
      %94 = sbr.rel (%p91) target = $region12
    $region11: #{tpu_custom_call.1} parent=5 // pred_region
      %s95 = ssub.s32 %s8, 1
      // Predicated region
      $region13: #{tpu_custom_call.1} parent=11 // pred_check
        %p96 = pneg %p55
      $region14: #{tpu_custom_call.1} parent=11 // pred_check_branch
        %98 = sbr.rel (%p96) target = $region16
      $region15: #{tpu_custom_call.1} parent=11 // pred_region
        _
      $region16: #{tpu_custom_call.1} parent=11 // pred_fallthru
        _
    $region12: #{tpu_custom_call.1} parent=5 // pred_fallthru
      _
    %p99 = scmp.lt.s32.totalorder %s8, 2
    // Predicated region
    $region17: #{tpu_custom_call.1} parent=5 // pred_check
      %p100 = pneg %p99
    $region18: #{tpu_custom_call.1} parent=5 // pred_check_branch
      %102 = sbr.rel (%p100) target = $region20
    $region19: #{tpu_custom_call.1} parent=5 // pred_region
      // Predicated region
      $region21: #{tpu_custom_call.1} parent=19 // pred_check
        %p103 = pneg %p28
      $region22: #{tpu_custom_call.1} parent=19 // pred_check_branch
        %105 = sbr.rel (%p103) target = $region24
      $region23: #{tpu_custom_call.1} parent=19 // pred_region
        %p106 = scmp.lt.s32.totalorder %s8, 1
        %s107 = scalar_select %p106, %s8, 1
        %s108 = smul.addr %s107, 9
        %s109 = smul.addr %s108, 8
        %s110 = scalar_lea.vmem %s0, %s109
      $region24: #{tpu_custom_call.1} parent=19 // pred_fallthru
        _
    $region20: #{tpu_custom_call.1} parent=5 // pred_fallthru
      _
    %p111 = scmp.le.s32.totalorder 1, %s8
    %p112 = scmp.lt.s32.totalorder %s8, 3
    %p113 = pnand %p111, %p112
    %p114 = pneg %p113
    // Predicated region
    $region25: #{tpu_custom_call.1} parent=5 // pred_check
      _
    $region26: #{tpu_custom_call.1} parent=5 // pred_check_branch
      %116 = sbr.rel (%p113) target = $region28
    $region27: #{tpu_custom_call.1} parent=5 // pred_region
      %s117 = ssub.s32 %s8, 1
      %p118 = scmp.lt.s32.totalorder %s13, 1
      %s119 = scalar_select %p118, %s13, 1
      %s120 = smul.addr %s119, 9
      %s121 = smul.addr %s120, 8
      %s122 = scalar_lea.vmem %s0, %s121
      %p123 = pneg %p34
      %p124 = pneg %p31
      %p125 = pneg %p55
      %p126 = pneg %p52
      %p127 = pneg %p81
      %p128 = pneg %p78
      %p129 = scmp.lt.s32.totalorder %s13, 1
      %s130 = scalar_select %p129, %s13, 1
      %s131 = smul.addr %s130, 9
      %s132 = smul.addr %s131, 8
      %s133 = scalar_lea.vmem %s2, %s132
      %p134 = scmp.lt.s32.totalorder %s13, 1
      %s135 = scalar_select %p134, %s13, 1
      %s136 = smul.addr %s135, 9
      %s137 = smul.addr %s136, 8
      %s138 = scalar_lea.vmem %s0, %s137
      %p139 = scmp.lt.s32.totalorder %s13, 1
      %s140 = scalar_select %p139, %s13, 1
      %s141 = smul.addr %s140, 9
      %s142 = smul.addr %s141, 8
      %s143 = scalar_lea.vmem %s2, %s142
      %v144 = vld [vmem:[%s138] sm:$0xff]
      %v145 = vld [vmem:[%s138 + $0x8] sm:$0xff]
      %v146 = vld [vmem:[%s138 + $0x10] sm:$0xff]
      %v147 = vld [vmem:[%s138 + $0x18] sm:$0xff]
      %v148 = vld [vmem:[%s138 + $0x20] sm:$0xff]
      %v149 = vld [vmem:[%s138 + $0x28] sm:$0xff]
      %v150 = vld [vmem:[%s138 + $0x30] sm:$0x3]
      %v151 = vld [vmem:[%s138 + $0x38] sm:$0x3]
      %v152 = vld [vmem:[%s138 + $0x40] sm:$0x3]
      %v153 = vld [vmem:[%s1] sm:$0xff]
      %v154 = vld [vmem:[%s1 + $0x8] sm:$0xff]
      %v155 = vld [vmem:[%s1 + $0x10] sm:$0xf]
      %s156 = scalar_lea.vmem %s1, 24
      %v157 = vld [vmem:[%s156] sm:$0xff]
      %v158 = vld [vmem:[%s156 + $0x8] sm:$0xff]
      %v159 = vld [vmem:[%s156 + $0x10] sm:$0xf]
      %169 = vrot.lane.b32.xlu0 %v144, 127
      %v170 = vpop.permute.xlu0 %169
      %171 = vrot.lane.b32.xlu0 %v145, 127
      %v172 = vpop.permute.xlu0 %171
      %173 = vrot.lane.b32.xlu0 %v146, 127
      %v174 = vpop.permute.xlu0 %173
      %175 = vrot.lane.b32.xlu0 %v147, 127
      %v176 = vpop.permute.xlu0 %175
      %177 = vrot.lane.b32.xlu0 %v148, 127
      %v178 = vpop.permute.xlu0 %177
      %179 = vrot.lane.b32.xlu0 %v149, 127
      %v180 = vpop.permute.xlu0 %179
      %181 = vrot.lane.b32.xlu0 %v150, 127
      %v182 = vpop.permute.xlu0 %181
      %183 = vrot.lane.b32.xlu0 %v151, 127
      %v184 = vpop.permute.xlu0 %183
      %185 = vrot.lane.b32.xlu0 %v152, 127
      %v186 = vpop.permute.xlu0 %185
      %vm187 = vcmask 1039360
      %v188 = vsel %vm187, %v170, %v172
      %v189 = vsel %vm187, %v172, %v174
      %v190 = vsel %vm187, %v176, %v178
      %v191 = vsel %vm187, %v178, %v180
      %v192 = vsel %vm187, %v182, %v184
      %v193 = vsel %vm187, %v184, %v186
      %vm200 = vcmask 146432
      %v202 = vsel %vm200, %v157, 0
      %v205 = vsel %vm200, %v158, 0
      %v208 = vsel %vm200, %v159, 0
      %vm210 = vcmask 1041408
      %v211 = vsel %vm210, %v192, 0
      %v213 = vsel %vm210, %v193, 0
      %v215 = vsel %vm210, %v186, 0
      %217 = vmatpush.msra.mxu0 0.0
      %218 = vmatpush.msra.mxu0 0.0
      %219 = vmatpush.msra.mxu0 0.0
      %220 = vmatpush.msra.mxu0 0.0
      %221 = vmatpush.msra.mxu0 0.0
      %222 = vmatpush.msra.mxu0 0.0
      %223 = vmatpush.msra.mxu0 0.0
      %224 = vmatpush.msra.mxu0 0.0
      %225 = vmatpush.msra.mxu0 0.0
      %226 = vmatpush.msra.mxu0 0.0
      %227 = vmatpush.msra.mxu0 0.0
      %228 = vmatpush.msra.mxu0 0.0
      %229 = vmatpush.msra.mxu0 0.0
      %230 = vmatpush.msra.mxu0 %v211
      %231 = vmatpush.msra.mxu0 %v190
      %232 = vmatpush.msra.mxu0 %v188
      %233 = vmatmul.f32.gmra.mxu0 %v202
      %v234 = vpop.f32.mrf.mxu0
      %v235 = vadd.f32 0.0, %v234
      %236 = vmatmul.f32.gmra.mxu0 %v205
      %v237 = vpop.f32.mrf.mxu0
      %v238 = vadd.f32 0.0, %v237
      %239 = vmatmul.f32.gmra.mxu0 %v208
      %v240 = vpop.f32.mrf.mxu0
      %v241 = vadd.f32 0.0, %v240
      %242 = vdwg.mxu0
      %243 = vmatpush.msra.mxu0 0.0
      %244 = vmatpush.msra.mxu0 0.0
      %245 = vmatpush.msra.mxu0 0.0
      %246 = vmatpush.msra.mxu0 0.0
      %247 = vmatpush.msra.mxu0 0.0
      %248 = vmatpush.msra.mxu0 0.0
      %249 = vmatpush.msra.mxu0 0.0
      %250 = vmatpush.msra.mxu0 0.0
      %251 = vmatpush.msra.mxu0 0.0
      %252 = vmatpush.msra.mxu0 0.0
      %253 = vmatpush.msra.mxu0 0.0
      %254 = vmatpush.msra.mxu0 0.0
      %255 = vmatpush.msra.mxu0 0.0
      %256 = vmatpush.msra.mxu0 %v213
      %257 = vmatpush.msra.mxu0 %v191
      %258 = vmatpush.msra.mxu0 %v189
      %259 = vmatmul.f32.gmra.mxu0 %v202
      %v260 = vpop.f32.mrf.mxu0
      %v261 = vadd.f32 0.0, %v260
      %262 = vmatmul.f32.gmra.mxu0 %v205
      %v263 = vpop.f32.mrf.mxu0
      %v264 = vadd.f32 0.0, %v263
      %265 = vmatmul.f32.gmra.mxu0 %v208
      %v266 = vpop.f32.mrf.mxu0
      %v267 = vadd.f32 0.0, %v266
      %268 = vdwg.mxu0
      %269 = vmatpush.msra.mxu0 0.0
      %270 = vmatpush.msra.mxu0 0.0
      %271 = vmatpush.msra.mxu0 0.0
      %272 = vmatpush.msra.mxu0 0.0
      %273 = vmatpush.msra.mxu0 0.0
      %274 = vmatpush.msra.mxu0 0.0
      %275 = vmatpush.msra.mxu0 0.0
      %276 = vmatpush.msra.mxu0 0.0
      %277 = vmatpush.msra.mxu0 0.0
      %278 = vmatpush.msra.mxu0 0.0
      %279 = vmatpush.msra.mxu0 0.0
      %280 = vmatpush.msra.mxu0 0.0
      %281 = vmatpush.msra.mxu0 0.0
      %282 = vmatpush.msra.mxu0 %v215
      %283 = vmatpush.msra.mxu0 %v180
      %284 = vmatpush.msra.mxu0 %v174
      %285 = vmatmul.f32.gmra.mxu0 %v202
      %v286 = vpop.f32.mrf.mxu0
      %v287 = vadd.f32 0.0, %v286
      %288 = vmatmul.f32.gmra.mxu0 %v205
      %v289 = vpop.f32.mrf.mxu0
      %v290 = vadd.f32 0.0, %v289
      %291 = vmatmul.f32.gmra.mxu0 %v208
      %v292 = vpop.f32.mrf.mxu0
      %v293 = vadd.f32 0.0, %v292
      %294 = vdwg.mxu0
      %v296 = vsel %vm200, %v153, 0
      %v299 = vsel %vm200, %v154, 0
      %v302 = vsel %vm200, %v155, 0
      %v304 = vsel %vm210, %v150, 0
      %v306 = vsel %vm210, %v151, 0
      %v308 = vsel %vm210, %v152, 0
      %310 = vmatpush.msra.mxu0 0.0
      %311 = vmatpush.msra.mxu0 0.0
      %312 = vmatpush.msra.mxu0 0.0
      %313 = vmatpush.msra.mxu0 0.0
      %314 = vmatpush.msra.mxu0 0.0
      %315 = vmatpush.msra.mxu0 0.0
      %316 = vmatpush.msra.mxu0 0.0
      %317 = vmatpush.msra.mxu0 0.0
      %318 = vmatpush.msra.mxu0 0.0
      %319 = vmatpush.msra.mxu0 0.0
      %320 = vmatpush.msra.mxu0 0.0
      %321 = vmatpush.msra.mxu0 0.0
      %322 = vmatpush.msra.mxu0 0.0
      %323 = vmatpush.msra.mxu0 %v304
      %324 = vmatpush.msra.mxu0 %v147
      %325 = vmatpush.msra.mxu0 %v144
      %326 = vmatmul.f32.gmra.mxu0 %v296
      %v327 = vpop.f32.mrf.mxu0
      %v328 = vadd.f32 %v235, %v327
      %329 = vmatmul.f32.gmra.mxu0 %v299
      %v330 = vpop.f32.mrf.mxu0
      %v331 = vadd.f32 %v238, %v330
      %332 = vmatmul.f32.gmra.mxu0 %v302
      %v333 = vpop.f32.mrf.mxu0
      %v334 = vadd.f32 %v241, %v333
      %335 = vdwg.mxu0
      %336 = vmatpush.msra.mxu0 0.0
      %337 = vmatpush.msra.mxu0 0.0
      %338 = vmatpush.msra.mxu0 0.0
      %339 = vmatpush.msra.mxu0 0.0
      %340 = vmatpush.msra.mxu0 0.0
      %341 = vmatpush.msra.mxu0 0.0
      %342 = vmatpush.msra.mxu0 0.0
      %343 = vmatpush.msra.mxu0 0.0
      %344 = vmatpush.msra.mxu0 0.0
      %345 = vmatpush.msra.mxu0 0.0
      %346 = vmatpush.msra.mxu0 0.0
      %347 = vmatpush.msra.mxu0 0.0
      %348 = vmatpush.msra.mxu0 0.0
      %349 = vmatpush.msra.mxu0 %v306
      %350 = vmatpush.msra.mxu0 %v148
      %351 = vmatpush.msra.mxu0 %v145
      %352 = vmatmul.f32.gmra.mxu0 %v296
      %v353 = vpop.f32.mrf.mxu0
      %v354 = vadd.f32 %v261, %v353
      %355 = vmatmul.f32.gmra.mxu0 %v299
      %v356 = vpop.f32.mrf.mxu0
      %v357 = vadd.f32 %v264, %v356
      %358 = vmatmul.f32.gmra.mxu0 %v302
      %v359 = vpop.f32.mrf.mxu0
      %v360 = vadd.f32 %v267, %v359
      %361 = vdwg.mxu0
      %362 = vmatpush.msra.mxu0 0.0
      %363 = vmatpush.msra.mxu0 0.0
      %364 = vmatpush.msra.mxu0 0.0
      %365 = vmatpush.msra.mxu0 0.0
      %366 = vmatpush.msra.mxu0 0.0
      %367 = vmatpush.msra.mxu0 0.0
      %368 = vmatpush.msra.mxu0 0.0
      %369 = vmatpush.msra.mxu0 0.0
      %370 = vmatpush.msra.mxu0 0.0
      %371 = vmatpush.msra.mxu0 0.0
      %372 = vmatpush.msra.mxu0 0.0
      %373 = vmatpush.msra.mxu0 0.0
      %374 = vmatpush.msra.mxu0 0.0
      %375 = vmatpush.msra.mxu0 %v308
      %376 = vmatpush.msra.mxu0 %v149
      %377 = vmatpush.msra.mxu0 %v146
      %378 = vmatmul.f32.gmra.mxu0 %v296
      %v379 = vpop.f32.mrf.mxu0
      %v380 = vadd.f32 %v287, %v379
      %381 = vmatmul.f32.gmra.mxu0 %v299
      %v382 = vpop.f32.mrf.mxu0
      %v383 = vadd.f32 %v290, %v382
      %384 = vmatmul.f32.gmra.mxu0 %v302
      %v385 = vpop.f32.mrf.mxu0
      %v386 = vadd.f32 %v293, %v385
      %387 = vdwg.mxu0
      %s388 = scalar_lea.vmem %s1, 48
      %v389 = vld [vmem:[%s388] sm:$0xff]
      %v390 = vld [vmem:[%s388 + $0x8] sm:$0xff]
      %v391 = vld [vmem:[%s388 + $0x10] sm:$0xf]
      %392 = vrot.lane.b32.xlu0 %v144, 126
      %v393 = vpop.permute.xlu0 %392
      %394 = vrot.lane.b32.xlu0 %v145, 126
      %v395 = vpop.permute.xlu0 %394
      %396 = vrot.lane.b32.xlu0 %v146, 126
      %v397 = vpop.permute.xlu0 %396
      %398 = vrot.lane.b32.xlu0 %v147, 126
      %v399 = vpop.permute.xlu0 %398
      %400 = vrot.lane.b32.xlu0 %v148, 126
      %v401 = vpop.permute.xlu0 %400
      %402 = vrot.lane.b32.xlu0 %v149, 126
      %v403 = vpop.permute.xlu0 %402
      %404 = vrot.lane.b32.xlu0 %v150, 126
      %v405 = vpop.permute.xlu0 %404
      %406 = vrot.lane.b32.xlu0 %v151, 126
      %v407 = vpop.permute.xlu0 %406
      %408 = vrot.lane.b32.xlu0 %v152, 126
      %v409 = vpop.permute.xlu0 %408
      %vm410 = vcmask 1031168
      %v411 = vsel %vm410, %v393, %v395
      %v412 = vsel %vm410, %v395, %v397
      %v413 = vsel %vm410, %v399, %v401
      %v414 = vsel %vm410, %v401, %v403
      %v415 = vsel %vm410, %v405, %v407
      %v416 = vsel %vm410, %v407, %v409
      %v424 = vsel %vm200, %v389, 0
      %v427 = vsel %vm200, %v390, 0
      %v430 = vsel %vm200, %v391, 0
      %v432 = vsel %vm210, %v415, 0
      %v434 = vsel %vm210, %v416, 0
      %v436 = vsel %vm210, %v409, 0
      %438 = vmatpush.msra.mxu0 0.0
      %439 = vmatpush.msra.mxu0 0.0
      %440 = vmatpush.msra.mxu0 0.0
      %441 = vmatpush.msra.mxu0 0.0
      %442 = vmatpush.msra.mxu0 0.0
      %443 = vmatpush.msra.mxu0 0.0
      %444 = vmatpush.msra.mxu0 0.0
      %445 = vmatpush.msra.mxu0 0.0
      %446 = vmatpush.msra.mxu0 0.0
      %447 = vmatpush.msra.mxu0 0.0
      %448 = vmatpush.msra.mxu0 0.0
      %449 = vmatpush.msra.mxu0 0.0
      %450 = vmatpush.msra.mxu0 0.0
      %451 = vmatpush.msra.mxu0 %v432
      %452 = vmatpush.msra.mxu0 %v413
      %453 = vmatpush.msra.mxu0 %v411
      %454 = vmatmul.f32.gmra.mxu0 %v424
      %v455 = vpop.f32.mrf.mxu0
      %v456 = vadd.f32 0.0, %v455
      %457 = vmatmul.f32.gmra.mxu0 %v427
      %v458 = vpop.f32.mrf.mxu0
      %v459 = vadd.f32 0.0, %v458
      %460 = vmatmul.f32.gmra.mxu0 %v430
      %v461 = vpop.f32.mrf.mxu0
      %v462 = vadd.f32 0.0, %v461
      %463 = vdwg.mxu0
      %464 = vmatpush.msra.mxu0 0.0
      %465 = vmatpush.msra.mxu0 0.0
      %466 = vmatpush.msra.mxu0 0.0
      %467 = vmatpush.msra.mxu0 0.0
      %468 = vmatpush.msra.mxu0 0.0
      %469 = vmatpush.msra.mxu0 0.0
      %470 = vmatpush.msra.mxu0 0.0
      %471 = vmatpush.msra.mxu0 0.0
      %472 = vmatpush.msra.mxu0 0.0
      %473 = vmatpush.msra.mxu0 0.0
      %474 = vmatpush.msra.mxu0 0.0
      %475 = vmatpush.msra.mxu0 0.0
      %476 = vmatpush.msra.mxu0 0.0
      %477 = vmatpush.msra.mxu0 %v434
      %478 = vmatpush.msra.mxu0 %v414
      %479 = vmatpush.msra.mxu0 %v412
      %480 = vmatmul.f32.gmra.mxu0 %v424
      %v481 = vpop.f32.mrf.mxu0
      %v482 = vadd.f32 0.0, %v481
      %483 = vmatmul.f32.gmra.mxu0 %v427
      %v484 = vpop.f32.mrf.mxu0
      %v485 = vadd.f32 0.0, %v484
      %486 = vmatmul.f32.gmra.mxu0 %v430
      %v487 = vpop.f32.mrf.mxu0
      %v488 = vadd.f32 0.0, %v487
      %489 = vdwg.mxu0
      %490 = vmatpush.msra.mxu0 0.0
      %491 = vmatpush.msra.mxu0 0.0
      %492 = vmatpush.msra.mxu0 0.0
      %493 = vmatpush.msra.mxu0 0.0
      %494 = vmatpush.msra.mxu0 0.0
      %495 = vmatpush.msra.mxu0 0.0
      %496 = vmatpush.msra.mxu0 0.0
      %497 = vmatpush.msra.mxu0 0.0
      %498 = vmatpush.msra.mxu0 0.0
      %499 = vmatpush.msra.mxu0 0.0
      %500 = vmatpush.msra.mxu0 0.0
      %501 = vmatpush.msra.mxu0 0.0
      %502 = vmatpush.msra.mxu0 0.0
      %503 = vmatpush.msra.mxu0 %v436
      %504 = vmatpush.msra.mxu0 %v403
      %505 = vmatpush.msra.mxu0 %v397
      %506 = vmatmul.f32.gmra.mxu0 %v424
      %v507 = vpop.f32.mrf.mxu0
      %v508 = vadd.f32 0.0, %v507
      %509 = vmatmul.f32.gmra.mxu0 %v427
      %v510 = vpop.f32.mrf.mxu0
      %v511 = vadd.f32 0.0, %v510
      %512 = vmatmul.f32.gmra.mxu0 %v430
      %v513 = vpop.f32.mrf.mxu0
      %v514 = vadd.f32 0.0, %v513
      %515 = vdwg.mxu0
      %v516 = vadd.f32 %v328, %v456
      %v517 = vadd.f32 %v354, %v482
      %v518 = vadd.f32 %v380, %v508
      %v519 = vadd.f32 %v331, %v459
      %v520 = vadd.f32 %v357, %v485
      %v521 = vadd.f32 %v383, %v511
      %v522 = vadd.f32 %v334, %v462
      %v523 = vadd.f32 %v360, %v488
      %v524 = vadd.f32 %v386, %v514
      %s525 = scalar_lea.vmem %s1, 72
      %v526 = vld [vmem:[%s525] sm:$0xff]
      %v527 = vld [vmem:[%s525 + $0x8] sm:$0xff]
      %v528 = vld [vmem:[%s525 + $0x10] sm:$0xf]
      %529 = vrot.lane.b32.xlu0 %v144, 110
      %v530 = vpop.permute.xlu0 %529
      %531 = vrot.lane.b32.xlu0 %v145, 110
      %v532 = vpop.permute.xlu0 %531
      %533 = vrot.lane.b32.xlu0 %v146, 110
      %v534 = vpop.permute.xlu0 %533
      %535 = vrot.lane.b32.xlu0 %v147, 110
      %v536 = vpop.permute.xlu0 %535
      %537 = vrot.lane.b32.xlu0 %v148, 110
      %v538 = vpop.permute.xlu0 %537
      %539 = vrot.lane.b32.xlu0 %v149, 110
      %v540 = vpop.permute.xlu0 %539
      %541 = vrot.lane.b32.xlu0 %v150, 110
      %v542 = vpop.permute.xlu0 %541
      %543 = vrot.lane.b32.xlu0 %v151, 110
      %v544 = vpop.permute.xlu0 %543
      %545 = vrot.lane.b32.xlu0 %v152, 110
      %v546 = vpop.permute.xlu0 %545
      %vm547 = vcmask 900096
      %v548 = vsel %vm547, %v530, %v532
      %v549 = vsel %vm547, %v532, %v534
      %v550 = vsel %vm547, %v536, %v538
      %v551 = vsel %vm547, %v538, %v540
      %v552 = vsel %vm547, %v542, %v544
      %v553 = vsel %vm547, %v544, %v546
      %v561 = vsel %vm200, %v526, 0
      %v564 = vsel %vm200, %v527, 0
      %v567 = vsel %vm200, %v528, 0
      %v569 = vsel %vm210, %v552, 0
      %v571 = vsel %vm210, %v553, 0
      %v573 = vsel %vm210, %v546, 0
      %575 = vmatpush.msra.mxu0 0.0
      %576 = vmatpush.msra.mxu0 0.0
      %577 = vmatpush.msra.mxu0 0.0
      %578 = vmatpush.msra.mxu0 0.0
      %579 = vmatpush.msra.mxu0 0.0
      %580 = vmatpush.msra.mxu0 0.0
      %581 = vmatpush.msra.mxu0 0.0
      %582 = vmatpush.msra.mxu0 0.0
      %583 = vmatpush.msra.mxu0 0.0
      %584 = vmatpush.msra.mxu0 0.0
      %585 = vmatpush.msra.mxu0 0.0
      %586 = vmatpush.msra.mxu0 0.0
      %587 = vmatpush.msra.mxu0 0.0
      %588 = vmatpush.msra.mxu0 %v569
      %589 = vmatpush.msra.mxu0 %v550
      %590 = vmatpush.msra.mxu0 %v548
      %591 = vmatmul.f32.gmra.mxu0 %v561
      %v592 = vpop.f32.mrf.mxu0
      %v593 = vadd.f32 0.0, %v592
      %594 = vmatmul.f32.gmra.mxu0 %v564
      %v595 = vpop.f32.mrf.mxu0
      %v596 = vadd.f32 0.0, %v595
      %597 = vmatmul.f32.gmra.mxu0 %v567
      %v598 = vpop.f32.mrf.mxu0
      %v599 = vadd.f32 0.0, %v598
      %600 = vdwg.mxu0
      %601 = vmatpush.msra.mxu0 0.0
      %602 = vmatpush.msra.mxu0 0.0
      %603 = vmatpush.msra.mxu0 0.0
      %604 = vmatpush.msra.mxu0 0.0
      %605 = vmatpush.msra.mxu0 0.0
      %606 = vmatpush.msra.mxu0 0.0
      %607 = vmatpush.msra.mxu0 0.0
      %608 = vmatpush.msra.mxu0 0.0
      %609 = vmatpush.msra.mxu0 0.0
      %610 = vmatpush.msra.mxu0 0.0
      %611 = vmatpush.msra.mxu0 0.0
      %612 = vmatpush.msra.mxu0 0.0
      %613 = vmatpush.msra.mxu0 0.0
      %614 = vmatpush.msra.mxu0 %v571
      %615 = vmatpush.msra.mxu0 %v551
      %616 = vmatpush.msra.mxu0 %v549
      %617 = vmatmul.f32.gmra.mxu0 %v561
      %v618 = vpop.f32.mrf.mxu0
      %v619 = vadd.f32 0.0, %v618
      %620 = vmatmul.f32.gmra.mxu0 %v564
      %v621 = vpop.f32.mrf.mxu0
      %v622 = vadd.f32 0.0, %v621
      %623 = vmatmul.f32.gmra.mxu0 %v567
      %v624 = vpop.f32.mrf.mxu0
      %v625 = vadd.f32 0.0, %v624
      %626 = vdwg.mxu0
      %627 = vmatpush.msra.mxu0 0.0
      %628 = vmatpush.msra.mxu0 0.0
      %629 = vmatpush.msra.mxu0 0.0
      %630 = vmatpush.msra.mxu0 0.0
      %631 = vmatpush.msra.mxu0 0.0
      %632 = vmatpush.msra.mxu0 0.0
      %633 = vmatpush.msra.mxu0 0.0
      %634 = vmatpush.msra.mxu0 0.0
      %635 = vmatpush.msra.mxu0 0.0
      %636 = vmatpush.msra.mxu0 0.0
      %637 = vmatpush.msra.mxu0 0.0
      %638 = vmatpush.msra.mxu0 0.0
      %639 = vmatpush.msra.mxu0 0.0
      %640 = vmatpush.msra.mxu0 %v573
      %641 = vmatpush.msra.mxu0 %v540
      %642 = vmatpush.msra.mxu0 %v534
      %643 = vmatmul.f32.gmra.mxu0 %v561
      %v644 = vpop.f32.mrf.mxu0
      %v645 = vadd.f32 0.0, %v644
      %646 = vmatmul.f32.gmra.mxu0 %v564
      %v647 = vpop.f32.mrf.mxu0
      %v648 = vadd.f32 0.0, %v647
      %649 = vmatmul.f32.gmra.mxu0 %v567
      %v650 = vpop.f32.mrf.mxu0
      %v651 = vadd.f32 0.0, %v650
      %652 = vdwg.mxu0
      %v653 = vadd.f32 %v516, %v593
      %v654 = vadd.f32 %v517, %v619
      %v655 = vadd.f32 %v518, %v645
      %v656 = vadd.f32 %v519, %v596
      %v657 = vadd.f32 %v520, %v622
      %v658 = vadd.f32 %v521, %v648
      %v659 = vadd.f32 %v522, %v599
      %v660 = vadd.f32 %v523, %v625
      %v661 = vadd.f32 %v524, %v651
      %s662 = scalar_lea.vmem %s1, 96
      %v663 = vld [vmem:[%s662] sm:$0xff]
      %v664 = vld [vmem:[%s662 + $0x8] sm:$0xff]
      %v665 = vld [vmem:[%s662 + $0x10] sm:$0xf]
      %666 = vrot.lane.b32.xlu0 %v144, 109
      %v667 = vpop.permute.xlu0 %666
      %668 = vrot.lane.b32.xlu0 %v145, 109
      %v669 = vpop.permute.xlu0 %668
      %670 = vrot.lane.b32.xlu0 %v146, 109
      %v671 = vpop.permute.xlu0 %670
      %672 = vrot.lane.b32.xlu0 %v147, 109
      %v673 = vpop.permute.xlu0 %672
      %674 = vrot.lane.b32.xlu0 %v148, 109
      %v675 = vpop.permute.xlu0 %674
      %676 = vrot.lane.b32.xlu0 %v149, 109
      %v677 = vpop.permute.xlu0 %676
      %678 = vrot.lane.b32.xlu0 %v150, 109
      %v679 = vpop.permute.xlu0 %678
      %680 = vrot.lane.b32.xlu0 %v151, 109
      %v681 = vpop.permute.xlu0 %680
      %682 = vrot.lane.b32.xlu0 %v152, 109
      %v683 = vpop.permute.xlu0 %682
      %vm684 = vcmask 891904
      %v685 = vsel %vm684, %v667, %v669
      %v686 = vsel %vm684, %v669, %v671
      %v687 = vsel %vm684, %v673, %v675
      %v688 = vsel %vm684, %v675, %v677
      %v689 = vsel %vm684, %v679, %v681
      %v690 = vsel %vm684, %v681, %v683
      %v698 = vsel %vm200, %v663, 0
      %v701 = vsel %vm200, %v664, 0
      %v704 = vsel %vm200, %v665, 0
      %v706 = vsel %vm210, %v689, 0
      %v708 = vsel %vm210, %v690, 0
      %v710 = vsel %vm210, %v683, 0
      %712 = vmatpush.msra.mxu0 0.0
      %713 = vmatpush.msra.mxu0 0.0
      %714 = vmatpush.msra.mxu0 0.0
      %715 = vmatpush.msra.mxu0 0.0
      %716 = vmatpush.msra.mxu0 0.0
      %717 = vmatpush.msra.mxu0 0.0
      %718 = vmatpush.msra.mxu0 0.0
      %719 = vmatpush.msra.mxu0 0.0
      %720 = vmatpush.msra.mxu0 0.0
      %721 = vmatpush.msra.mxu0 0.0
      %722 = vmatpush.msra.mxu0 0.0
      %723 = vmatpush.msra.mxu0 0.0
      %724 = vmatpush.msra.mxu0 0.0
      %725 = vmatpush.msra.mxu0 %v706
      %726 = vmatpush.msra.mxu0 %v687
      %727 = vmatpush.msra.mxu0 %v685
      %728 = vmatmul.f32.gmra.mxu0 %v698
      %v729 = vpop.f32.mrf.mxu0
      %v730 = vadd.f32 0.0, %v729
      %731 = vmatmul.f32.gmra.mxu0 %v701
      %v732 = vpop.f32.mrf.mxu0
      %v733 = vadd.f32 0.0, %v732
      %734 = vmatmul.f32.gmra.mxu0 %v704
      %v735 = vpop.f32.mrf.mxu0
      %v736 = vadd.f32 0.0, %v735
      %737 = vdwg.mxu0
      %738 = vmatpush.msra.mxu0 0.0
      %739 = vmatpush.msra.mxu0 0.0
      %740 = vmatpush.msra.mxu0 0.0
      %741 = vmatpush.msra.mxu0 0.0
      %742 = vmatpush.msra.mxu0 0.0
      %743 = vmatpush.msra.mxu0 0.0
      %744 = vmatpush.msra.mxu0 0.0
      %745 = vmatpush.msra.mxu0 0.0
      %746 = vmatpush.msra.mxu0 0.0
      %747 = vmatpush.msra.mxu0 0.0
      %748 = vmatpush.msra.mxu0 0.0
      %749 = vmatpush.msra.mxu0 0.0
      %750 = vmatpush.msra.mxu0 0.0
      %751 = vmatpush.msra.mxu0 %v708
      %752 = vmatpush.msra.mxu0 %v688
      %753 = vmatpush.msra.mxu0 %v686
      %754 = vmatmul.f32.gmra.mxu0 %v698
      %v755 = vpop.f32.mrf.mxu0
      %v756 = vadd.f32 0.0, %v755
      %757 = vmatmul.f32.gmra.mxu0 %v701
      %v758 = vpop.f32.mrf.mxu0
      %v759 = vadd.f32 0.0, %v758
      %760 = vmatmul.f32.gmra.mxu0 %v704
      %v761 = vpop.f32.mrf.mxu0
      %v762 = vadd.f32 0.0, %v761
      %763 = vdwg.mxu0
      %764 = vmatpush.msra.mxu0 0.0
      %765 = vmatpush.msra.mxu0 0.0
      %766 = vmatpush.msra.mxu0 0.0
      %767 = vmatpush.msra.mxu0 0.0
      %768 = vmatpush.msra.mxu0 0.0
      %769 = vmatpush.msra.mxu0 0.0
      %770 = vmatpush.msra.mxu0 0.0
      %771 = vmatpush.msra.mxu0 0.0
      %772 = vmatpush.msra.mxu0 0.0
      %773 = vmatpush.msra.mxu0 0.0
      %774 = vmatpush.msra.mxu0 0.0
      %775 = vmatpush.msra.mxu0 0.0
      %776 = vmatpush.msra.mxu0 0.0
      %777 = vmatpush.msra.mxu0 %v710
      %778 = vmatpush.msra.mxu0 %v677
      %779 = vmatpush.msra.mxu0 %v671
      %780 = vmatmul.f32.gmra.mxu0 %v698
      %v781 = vpop.f32.mrf.mxu0
      %v782 = vadd.f32 0.0, %v781
      %783 = vmatmul.f32.gmra.mxu0 %v701
      %v784 = vpop.f32.mrf.mxu0
      %v785 = vadd.f32 0.0, %v784
      %786 = vmatmul.f32.gmra.mxu0 %v704
      %v787 = vpop.f32.mrf.mxu0
      %v788 = vadd.f32 0.0, %v787
      %789 = vdwg.mxu0
      %v790 = vadd.f32 %v653, %v730
      %v791 = vadd.f32 %v654, %v756
      %v792 = vadd.f32 %v655, %v782
      %v793 = vadd.f32 %v656, %v733
      %v794 = vadd.f32 %v657, %v759
      %v795 = vadd.f32 %v658, %v785
      %v796 = vadd.f32 %v659, %v736
      %v797 = vadd.f32 %v660, %v762
      %v798 = vadd.f32 %v661, %v788
      %s799 = scalar_lea.vmem %s1, 120
      %v800 = vld [vmem:[%s799] sm:$0xff]
      %v801 = vld [vmem:[%s799 + $0x8] sm:$0xff]
      %v802 = vld [vmem:[%s799 + $0x10] sm:$0xf]
      %803 = vrot.lane.b32.xlu0 %v144, 108
      %v804 = vpop.permute.xlu0 %803
      %805 = vrot.lane.b32.xlu0 %v145, 108
      %v806 = vpop.permute.xlu0 %805
      %807 = vrot.lane.b32.xlu0 %v146, 108
      %v808 = vpop.permute.xlu0 %807
      %809 = vrot.lane.b32.xlu0 %v147, 108
      %v810 = vpop.permute.xlu0 %809
      %811 = vrot.lane.b32.xlu0 %v148, 108
      %v812 = vpop.permute.xlu0 %811
      %813 = vrot.lane.b32.xlu0 %v149, 108
      %v814 = vpop.permute.xlu0 %813
      %815 = vrot.lane.b32.xlu0 %v150, 108
      %v816 = vpop.permute.xlu0 %815
      %817 = vrot.lane.b32.xlu0 %v151, 108
      %v818 = vpop.permute.xlu0 %817
      %819 = vrot.lane.b32.xlu0 %v152, 108
      %v820 = vpop.permute.xlu0 %819
      %vm821 = vcmask 883712
      %v822 = vsel %vm821, %v804, %v806
      %v823 = vsel %vm821, %v806, %v808
      %v824 = vsel %vm821, %v810, %v812
      %v825 = vsel %vm821, %v812, %v814
      %v826 = vsel %vm821, %v816, %v818
      %v827 = vsel %vm821, %v818, %v820
      %v835 = vsel %vm200, %v800, 0
      %v838 = vsel %vm200, %v801, 0
      %v841 = vsel %vm200, %v802, 0
      %v843 = vsel %vm210, %v826, 0
      %v845 = vsel %vm210, %v827, 0
      %v847 = vsel %vm210, %v820, 0
      %849 = vmatpush.msra.mxu0 0.0
      %850 = vmatpush.msra.mxu0 0.0
      %851 = vmatpush.msra.mxu0 0.0
      %852 = vmatpush.msra.mxu0 0.0
      %853 = vmatpush.msra.mxu0 0.0
      %854 = vmatpush.msra.mxu0 0.0
      %855 = vmatpush.msra.mxu0 0.0
      %856 = vmatpush.msra.mxu0 0.0
      %857 = vmatpush.msra.mxu0 0.0
      %858 = vmatpush.msra.mxu0 0.0
      %859 = vmatpush.msra.mxu0 0.0
      %860 = vmatpush.msra.mxu0 0.0
      %861 = vmatpush.msra.mxu0 0.0
      %862 = vmatpush.msra.mxu0 %v843
      %863 = vmatpush.msra.mxu0 %v824
      %864 = vmatpush.msra.mxu0 %v822
      %865 = vmatmul.f32.gmra.mxu0 %v835
      %v866 = vpop.f32.mrf.mxu0
      %v867 = vadd.f32 0.0, %v866
      %868 = vmatmul.f32.gmra.mxu0 %v838
      %v869 = vpop.f32.mrf.mxu0
      %v870 = vadd.f32 0.0, %v869
      %871 = vmatmul.f32.gmra.mxu0 %v841
      %v872 = vpop.f32.mrf.mxu0
      %v873 = vadd.f32 0.0, %v872
      %874 = vdwg.mxu0
      %875 = vmatpush.msra.mxu0 0.0
      %876 = vmatpush.msra.mxu0 0.0
      %877 = vmatpush.msra.mxu0 0.0
      %878 = vmatpush.msra.mxu0 0.0
      %879 = vmatpush.msra.mxu0 0.0
      %880 = vmatpush.msra.mxu0 0.0
      %881 = vmatpush.msra.mxu0 0.0
      %882 = vmatpush.msra.mxu0 0.0
      %883 = vmatpush.msra.mxu0 0.0
      %884 = vmatpush.msra.mxu0 0.0
      %885 = vmatpush.msra.mxu0 0.0
      %886 = vmatpush.msra.mxu0 0.0
      %887 = vmatpush.msra.mxu0 0.0
      %888 = vmatpush.msra.mxu0 %v845
      %889 = vmatpush.msra.mxu0 %v825
      %890 = vmatpush.msra.mxu0 %v823
      %891 = vmatmul.f32.gmra.mxu0 %v835
      %v892 = vpop.f32.mrf.mxu0
      %v893 = vadd.f32 0.0, %v892
      %894 = vmatmul.f32.gmra.mxu0 %v838
      %v895 = vpop.f32.mrf.mxu0
      %v896 = vadd.f32 0.0, %v895
      %897 = vmatmul.f32.gmra.mxu0 %v841
      %v898 = vpop.f32.mrf.mxu0
      %v899 = vadd.f32 0.0, %v898
      %900 = vdwg.mxu0
      %901 = vmatpush.msra.mxu0 0.0
      %902 = vmatpush.msra.mxu0 0.0
      %903 = vmatpush.msra.mxu0 0.0
      %904 = vmatpush.msra.mxu0 0.0
      %905 = vmatpush.msra.mxu0 0.0
      %906 = vmatpush.msra.mxu0 0.0
      %907 = vmatpush.msra.mxu0 0.0
      %908 = vmatpush.msra.mxu0 0.0
      %909 = vmatpush.msra.mxu0 0.0
      %910 = vmatpush.msra.mxu0 0.0
      %911 = vmatpush.msra.mxu0 0.0
      %912 = vmatpush.msra.mxu0 0.0
      %913 = vmatpush.msra.mxu0 0.0
      %914 = vmatpush.msra.mxu0 %v847
      %915 = vmatpush.msra.mxu0 %v814
      %916 = vmatpush.msra.mxu0 %v808
      %917 = vmatmul.f32.gmra.mxu0 %v835
      %v918 = vpop.f32.mrf.mxu0
      %v919 = vadd.f32 0.0, %v918
      %920 = vmatmul.f32.gmra.mxu0 %v838
      %v921 = vpop.f32.mrf.mxu0
      %v922 = vadd.f32 0.0, %v921
      %923 = vmatmul.f32.gmra.mxu0 %v841
      %v924 = vpop.f32.mrf.mxu0
      %v925 = vadd.f32 0.0, %v924
      %926 = vdwg.mxu0
      %v927 = vadd.f32 %v790, %v867
      %v928 = vadd.f32 %v791, %v893
      %v929 = vadd.f32 %v792, %v919
      %v930 = vadd.f32 %v793, %v870
      %v931 = vadd.f32 %v794, %v896
      %v932 = vadd.f32 %v795, %v922
      %v933 = vadd.f32 %v796, %v873
      %v934 = vadd.f32 %v797, %v899
      %v935 = vadd.f32 %v798, %v925
      %s936 = scalar_lea.vmem %s1, 144
      %v937 = vld [vmem:[%s936] sm:$0xff]
      %v938 = vld [vmem:[%s936 + $0x8] sm:$0xff]
      %v939 = vld [vmem:[%s936 + $0x10] sm:$0xf]
      %940 = vrot.lane.b32.xlu0 %v144, 92
      %v941 = vpop.permute.xlu0 %940
      %942 = vrot.lane.b32.xlu0 %v145, 92
      %v943 = vpop.permute.xlu0 %942
      %944 = vrot.lane.b32.xlu0 %v146, 92
      %v945 = vpop.permute.xlu0 %944
      %946 = vrot.lane.b32.xlu0 %v147, 92
      %v947 = vpop.permute.xlu0 %946
      %948 = vrot.lane.b32.xlu0 %v148, 92
      %v949 = vpop.permute.xlu0 %948
      %950 = vrot.lane.b32.xlu0 %v149, 92
      %v951 = vpop.permute.xlu0 %950
      %952 = vrot.lane.b32.xlu0 %v150, 92
      %v953 = vpop.permute.xlu0 %952
      %954 = vrot.lane.b32.xlu0 %v151, 92
      %v955 = vpop.permute.xlu0 %954
      %956 = vrot.lane.b32.xlu0 %v152, 92
      %v957 = vpop.permute.xlu0 %956
      %vm958 = vcmask 752640
      %v959 = vsel %vm958, %v941, %v943
      %v960 = vsel %vm958, %v943, %v945
      %v961 = vsel %vm958, %v947, %v949
      %v962 = vsel %vm958, %v949, %v951
      %v963 = vsel %vm958, %v953, %v955
      %v964 = vsel %vm958, %v955, %v957
      %v972 = vsel %vm200, %v937, 0
      %v975 = vsel %vm200, %v938, 0
      %v978 = vsel %vm200, %v939, 0
      %v980 = vsel %vm210, %v963, 0
      %v982 = vsel %vm210, %v964, 0
      %v984 = vsel %vm210, %v957, 0
      %986 = vmatpush.msra.mxu0 0.0
      %987 = vmatpush.msra.mxu0 0.0
      %988 = vmatpush.msra.mxu0 0.0
      %989 = vmatpush.msra.mxu0 0.0
      %990 = vmatpush.msra.mxu0 0.0
      %991 = vmatpush.msra.mxu0 0.0
      %992 = vmatpush.msra.mxu0 0.0
      %993 = vmatpush.msra.mxu0 0.0
      %994 = vmatpush.msra.mxu0 0.0
      %995 = vmatpush.msra.mxu0 0.0
      %996 = vmatpush.msra.mxu0 0.0
      %997 = vmatpush.msra.mxu0 0.0
      %998 = vmatpush.msra.mxu0 0.0
      %999 = vmatpush.msra.mxu0 %v980
      %1000 = vmatpush.msra.mxu0 %v961
      %1001 = vmatpush.msra.mxu0 %v959
      %1002 = vmatmul.f32.gmra.mxu0 %v972
      %v1003 = vpop.f32.mrf.mxu0
      %v1004 = vadd.f32 0.0, %v1003
      %1005 = vmatmul.f32.gmra.mxu0 %v975
      %v1006 = vpop.f32.mrf.mxu0
      %v1007 = vadd.f32 0.0, %v1006
      %1008 = vmatmul.f32.gmra.mxu0 %v978
      %v1009 = vpop.f32.mrf.mxu0
      %v1010 = vadd.f32 0.0, %v1009
      %1011 = vdwg.mxu0
      %1012 = vmatpush.msra.mxu0 0.0
      %1013 = vmatpush.msra.mxu0 0.0
      %1014 = vmatpush.msra.mxu0 0.0
      %1015 = vmatpush.msra.mxu0 0.0
      %1016 = vmatpush.msra.mxu0 0.0
      %1017 = vmatpush.msra.mxu0 0.0
      %1018 = vmatpush.msra.mxu0 0.0
      %1019 = vmatpush.msra.mxu0 0.0
      %1020 = vmatpush.msra.mxu0 0.0
      %1021 = vmatpush.msra.mxu0 0.0
      %1022 = vmatpush.msra.mxu0 0.0
      %1023 = vmatpush.msra.mxu0 0.0
      %1024 = vmatpush.msra.mxu0 0.0
      %1025 = vmatpush.msra.mxu0 %v982
      %1026 = vmatpush.msra.mxu0 %v962
      %1027 = vmatpush.msra.mxu0 %v960
      %1028 = vmatmul.f32.gmra.mxu0 %v972
      %v1029 = vpop.f32.mrf.mxu0
      %v1030 = vadd.f32 0.0, %v1029
      %1031 = vmatmul.f32.gmra.mxu0 %v975
      %v1032 = vpop.f32.mrf.mxu0
      %v1033 = vadd.f32 0.0, %v1032
      %1034 = vmatmul.f32.gmra.mxu0 %v978
      %v1035 = vpop.f32.mrf.mxu0
      %v1036 = vadd.f32 0.0, %v1035
      %1037 = vdwg.mxu0
      %1038 = vmatpush.msra.mxu0 0.0
      %1039 = vmatpush.msra.mxu0 0.0
      %1040 = vmatpush.msra.mxu0 0.0
      %1041 = vmatpush.msra.mxu0 0.0
      %1042 = vmatpush.msra.mxu0 0.0
      %1043 = vmatpush.msra.mxu0 0.0
      %1044 = vmatpush.msra.mxu0 0.0
      %1045 = vmatpush.msra.mxu0 0.0
      %1046 = vmatpush.msra.mxu0 0.0
      %1047 = vmatpush.msra.mxu0 0.0
      %1048 = vmatpush.msra.mxu0 0.0
      %1049 = vmatpush.msra.mxu0 0.0
      %1050 = vmatpush.msra.mxu0 0.0
      %1051 = vmatpush.msra.mxu0 %v984
      %1052 = vmatpush.msra.mxu0 %v951
      %1053 = vmatpush.msra.mxu0 %v945
      %1054 = vmatmul.f32.gmra.mxu0 %v972
      %v1055 = vpop.f32.mrf.mxu0
      %v1056 = vadd.f32 0.0, %v1055
      %1057 = vmatmul.f32.gmra.mxu0 %v975
      %v1058 = vpop.f32.mrf.mxu0
      %v1059 = vadd.f32 0.0, %v1058
      %1060 = vmatmul.f32.gmra.mxu0 %v978
      %v1061 = vpop.f32.mrf.mxu0
      %v1062 = vadd.f32 0.0, %v1061
      %1063 = vdwg.mxu0
      %v1064 = vadd.f32 %v927, %v1004
      %v1065 = vadd.f32 %v928, %v1030
      %v1066 = vadd.f32 %v929, %v1056
      %v1067 = vadd.f32 %v930, %v1007
      %v1068 = vadd.f32 %v931, %v1033
      %v1069 = vadd.f32 %v932, %v1059
      %v1070 = vadd.f32 %v933, %v1010
      %v1071 = vadd.f32 %v934, %v1036
      %v1072 = vadd.f32 %v935, %v1062
      %s1073 = scalar_lea.vmem %s1, 168
      %v1074 = vld [vmem:[%s1073] sm:$0xff]
      %v1075 = vld [vmem:[%s1073 + $0x8] sm:$0xff]
      %v1076 = vld [vmem:[%s1073 + $0x10] sm:$0xf]
      %1077 = vrot.lane.b32.xlu0 %v144, 91
      %v1078 = vpop.permute.xlu0 %1077
      %1079 = vrot.lane.b32.xlu0 %v145, 91
      %v1080 = vpop.permute.xlu0 %1079
      %1081 = vrot.lane.b32.xlu0 %v146, 91
      %v1082 = vpop.permute.xlu0 %1081
      %1083 = vrot.lane.b32.xlu0 %v147, 91
      %v1084 = vpop.permute.xlu0 %1083
      %1085 = vrot.lane.b32.xlu0 %v148, 91
      %v1086 = vpop.permute.xlu0 %1085
      %1087 = vrot.lane.b32.xlu0 %v149, 91
      %v1088 = vpop.permute.xlu0 %1087
      %1089 = vrot.lane.b32.xlu0 %v150, 91
      %v1090 = vpop.permute.xlu0 %1089
      %1091 = vrot.lane.b32.xlu0 %v151, 91
      %v1092 = vpop.permute.xlu0 %1091
      %1093 = vrot.lane.b32.xlu0 %v152, 91
      %v1094 = vpop.permute.xlu0 %1093
      %vm1095 = vcmask 744448
      %v1096 = vsel %vm1095, %v1078, %v1080
      %v1097 = vsel %vm1095, %v1080, %v1082
      %v1098 = vsel %vm1095, %v1084, %v1086
      %v1099 = vsel %vm1095, %v1086, %v1088
      %v1100 = vsel %vm1095, %v1090, %v1092
      %v1101 = vsel %vm1095, %v1092, %v1094
      %v1109 = vsel %vm200, %v1074, 0
      %v1112 = vsel %vm200, %v1075, 0
      %v1115 = vsel %vm200, %v1076, 0
      %v1117 = vsel %vm210, %v1100, 0
      %v1119 = vsel %vm210, %v1101, 0
      %v1121 = vsel %vm210, %v1094, 0
      %1123 = vmatpush.msra.mxu0 0.0
      %1124 = vmatpush.msra.mxu0 0.0
      %1125 = vmatpush.msra.mxu0 0.0
      %1126 = vmatpush.msra.mxu0 0.0
      %1127 = vmatpush.msra.mxu0 0.0
      %1128 = vmatpush.msra.mxu0 0.0
      %1129 = vmatpush.msra.mxu0 0.0
      %1130 = vmatpush.msra.mxu0 0.0
      %1131 = vmatpush.msra.mxu0 0.0
      %1132 = vmatpush.msra.mxu0 0.0
      %1133 = vmatpush.msra.mxu0 0.0
      %1134 = vmatpush.msra.mxu0 0.0
      %1135 = vmatpush.msra.mxu0 0.0
      %1136 = vmatpush.msra.mxu0 %v1117
      %1137 = vmatpush.msra.mxu0 %v1098
      %1138 = vmatpush.msra.mxu0 %v1096
      %1139 = vmatmul.f32.gmra.mxu0 %v1109
      %v1140 = vpop.f32.mrf.mxu0
      %v1141 = vadd.f32 0.0, %v1140
      %1142 = vmatmul.f32.gmra.mxu0 %v1112
      %v1143 = vpop.f32.mrf.mxu0
      %v1144 = vadd.f32 0.0, %v1143
      %1145 = vmatmul.f32.gmra.mxu0 %v1115
      %v1146 = vpop.f32.mrf.mxu0
      %v1147 = vadd.f32 0.0, %v1146
      %1148 = vdwg.mxu0
      %1149 = vmatpush.msra.mxu0 0.0
      %1150 = vmatpush.msra.mxu0 0.0
      %1151 = vmatpush.msra.mxu0 0.0
      %1152 = vmatpush.msra.mxu0 0.0
      %1153 = vmatpush.msra.mxu0 0.0
      %1154 = vmatpush.msra.mxu0 0.0
      %1155 = vmatpush.msra.mxu0 0.0
      %1156 = vmatpush.msra.mxu0 0.0
      %1157 = vmatpush.msra.mxu0 0.0
      %1158 = vmatpush.msra.mxu0 0.0
      %1159 = vmatpush.msra.mxu0 0.0
      %1160 = vmatpush.msra.mxu0 0.0
      %1161 = vmatpush.msra.mxu0 0.0
      %1162 = vmatpush.msra.mxu0 %v1119
      %1163 = vmatpush.msra.mxu0 %v1099
      %1164 = vmatpush.msra.mxu0 %v1097
      %1165 = vmatmul.f32.gmra.mxu0 %v1109
      %v1166 = vpop.f32.mrf.mxu0
      %v1167 = vadd.f32 0.0, %v1166
      %1168 = vmatmul.f32.gmra.mxu0 %v1112
      %v1169 = vpop.f32.mrf.mxu0
      %v1170 = vadd.f32 0.0, %v1169
      %1171 = vmatmul.f32.gmra.mxu0 %v1115
      %v1172 = vpop.f32.mrf.mxu0
      %v1173 = vadd.f32 0.0, %v1172
      %1174 = vdwg.mxu0
      %1175 = vmatpush.msra.mxu0 0.0
      %1176 = vmatpush.msra.mxu0 0.0
      %1177 = vmatpush.msra.mxu0 0.0
      %1178 = vmatpush.msra.mxu0 0.0
      %1179 = vmatpush.msra.mxu0 0.0
      %1180 = vmatpush.msra.mxu0 0.0
      %1181 = vmatpush.msra.mxu0 0.0
      %1182 = vmatpush.msra.mxu0 0.0
      %1183 = vmatpush.msra.mxu0 0.0
      %1184 = vmatpush.msra.mxu0 0.0
      %1185 = vmatpush.msra.mxu0 0.0
      %1186 = vmatpush.msra.mxu0 0.0
      %1187 = vmatpush.msra.mxu0 0.0
      %1188 = vmatpush.msra.mxu0 %v1121
      %1189 = vmatpush.msra.mxu0 %v1088
      %1190 = vmatpush.msra.mxu0 %v1082
      %1191 = vmatmul.f32.gmra.mxu0 %v1109
      %v1192 = vpop.f32.mrf.mxu0
      %v1193 = vadd.f32 0.0, %v1192
      %1194 = vmatmul.f32.gmra.mxu0 %v1112
      %v1195 = vpop.f32.mrf.mxu0
      %v1196 = vadd.f32 0.0, %v1195
      %1197 = vmatmul.f32.gmra.mxu0 %v1115
      %v1198 = vpop.f32.mrf.mxu0
      %v1199 = vadd.f32 0.0, %v1198
      %1200 = vdwg.mxu0
      %v1201 = vadd.f32 %v1064, %v1141
      %v1202 = vadd.f32 %v1065, %v1167
      %v1203 = vadd.f32 %v1066, %v1193
      %v1204 = vadd.f32 %v1067, %v1144
      %v1205 = vadd.f32 %v1068, %v1170
      %v1206 = vadd.f32 %v1069, %v1196
      %v1207 = vadd.f32 %v1070, %v1147
      %v1208 = vadd.f32 %v1071, %v1173
      %v1209 = vadd.f32 %v1072, %v1199
      %s1210 = scalar_lea.vmem %s1, 192
      %v1211 = vld [vmem:[%s1210] sm:$0xff]
      %v1212 = vld [vmem:[%s1210 + $0x8] sm:$0xff]
      %v1213 = vld [vmem:[%s1210 + $0x10] sm:$0xf]
      %1214 = vrot.lane.b32.xlu0 %v144, 90
      %v1215 = vpop.permute.xlu0 %1214
      %1216 = vrot.lane.b32.xlu0 %v145, 90
      %v1217 = vpop.permute.xlu0 %1216
      %1218 = vrot.lane.b32.xlu0 %v146, 90
      %v1219 = vpop.permute.xlu0 %1218
      %1220 = vrot.lane.b32.xlu0 %v147, 90
      %v1221 = vpop.permute.xlu0 %1220
      %1222 = vrot.lane.b32.xlu0 %v148, 90
      %v1223 = vpop.permute.xlu0 %1222
      %1224 = vrot.lane.b32.xlu0 %v149, 90
      %v1225 = vpop.permute.xlu0 %1224
      %1226 = vrot.lane.b32.xlu0 %v150, 90
      %v1227 = vpop.permute.xlu0 %1226
      %1228 = vrot.lane.b32.xlu0 %v151, 90
      %v1229 = vpop.permute.xlu0 %1228
      %1230 = vrot.lane.b32.xlu0 %v152, 90
      %v1231 = vpop.permute.xlu0 %1230
      %vm1232 = vcmask 736256
      %v1233 = vsel %vm1232, %v1215, %v1217
      %v1234 = vsel %vm1232, %v1217, %v1219
      %v1235 = vsel %vm1232, %v1221, %v1223
      %v1236 = vsel %vm1232, %v1223, %v1225
      %v1237 = vsel %vm1232, %v1227, %v1229
      %v1238 = vsel %vm1232, %v1229, %v1231
      %v1246 = vsel %vm200, %v1211, 0
      %v1249 = vsel %vm200, %v1212, 0
      %v1252 = vsel %vm200, %v1213, 0
      %v1254 = vsel %vm210, %v1237, 0
      %v1256 = vsel %vm210, %v1238, 0
      %v1258 = vsel %vm210, %v1231, 0
      %1260 = vmatpush.msra.mxu0 0.0
      %1261 = vmatpush.msra.mxu0 0.0
      %1262 = vmatpush.msra.mxu0 0.0
      %1263 = vmatpush.msra.mxu0 0.0
      %1264 = vmatpush.msra.mxu0 0.0
      %1265 = vmatpush.msra.mxu0 0.0
      %1266 = vmatpush.msra.mxu0 0.0
      %1267 = vmatpush.msra.mxu0 0.0
      %1268 = vmatpush.msra.mxu0 0.0
      %1269 = vmatpush.msra.mxu0 0.0
      %1270 = vmatpush.msra.mxu0 0.0
      %1271 = vmatpush.msra.mxu0 0.0
      %1272 = vmatpush.msra.mxu0 0.0
      %1273 = vmatpush.msra.mxu0 %v1254
      %1274 = vmatpush.msra.mxu0 %v1235
      %1275 = vmatpush.msra.mxu0 %v1233
      %1276 = vmatmul.f32.gmra.mxu0 %v1246
      %v1277 = vpop.f32.mrf.mxu0
      %v1278 = vadd.f32 0.0, %v1277
      %1279 = vmatmul.f32.gmra.mxu0 %v1249
      %v1280 = vpop.f32.mrf.mxu0
      %v1281 = vadd.f32 0.0, %v1280
      %1282 = vmatmul.f32.gmra.mxu0 %v1252
      %v1283 = vpop.f32.mrf.mxu0
      %v1284 = vadd.f32 0.0, %v1283
      %1285 = vdwg.mxu0
      %1286 = vmatpush.msra.mxu0 0.0
      %1287 = vmatpush.msra.mxu0 0.0
      %1288 = vmatpush.msra.mxu0 0.0
      %1289 = vmatpush.msra.mxu0 0.0
      %1290 = vmatpush.msra.mxu0 0.0
      %1291 = vmatpush.msra.mxu0 0.0
      %1292 = vmatpush.msra.mxu0 0.0
      %1293 = vmatpush.msra.mxu0 0.0
      %1294 = vmatpush.msra.mxu0 0.0
      %1295 = vmatpush.msra.mxu0 0.0
      %1296 = vmatpush.msra.mxu0 0.0
      %1297 = vmatpush.msra.mxu0 0.0
      %1298 = vmatpush.msra.mxu0 0.0
      %1299 = vmatpush.msra.mxu0 %v1256
      %1300 = vmatpush.msra.mxu0 %v1236
      %1301 = vmatpush.msra.mxu0 %v1234
      %1302 = vmatmul.f32.gmra.mxu0 %v1246
      %v1303 = vpop.f32.mrf.mxu0
      %v1304 = vadd.f32 0.0, %v1303
      %1305 = vmatmul.f32.gmra.mxu0 %v1249
      %v1306 = vpop.f32.mrf.mxu0
      %v1307 = vadd.f32 0.0, %v1306
      %1308 = vmatmul.f32.gmra.mxu0 %v1252
      %v1309 = vpop.f32.mrf.mxu0
      %v1310 = vadd.f32 0.0, %v1309
      %1311 = vdwg.mxu0
      %1312 = vmatpush.msra.mxu0 0.0
      %1313 = vmatpush.msra.mxu0 0.0
      %1314 = vmatpush.msra.mxu0 0.0
      %1315 = vmatpush.msra.mxu0 0.0
      %1316 = vmatpush.msra.mxu0 0.0
      %1317 = vmatpush.msra.mxu0 0.0
      %1318 = vmatpush.msra.mxu0 0.0
      %1319 = vmatpush.msra.mxu0 0.0
      %1320 = vmatpush.msra.mxu0 0.0
      %1321 = vmatpush.msra.mxu0 0.0
      %1322 = vmatpush.msra.mxu0 0.0
      %1323 = vmatpush.msra.mxu0 0.0
      %1324 = vmatpush.msra.mxu0 0.0
      %1325 = vmatpush.msra.mxu0 %v1258
      %1326 = vmatpush.msra.mxu0 %v1225
      %1327 = vmatpush.msra.mxu0 %v1219
      %1328 = vmatmul.f32.gmra.mxu0 %v1246
      %v1329 = vpop.f32.mrf.mxu0
      %v1330 = vadd.f32 0.0, %v1329
      %1331 = vmatmul.f32.gmra.mxu0 %v1249
      %v1332 = vpop.f32.mrf.mxu0
      %v1333 = vadd.f32 0.0, %v1332
      %1334 = vmatmul.f32.gmra.mxu0 %v1252
      %v1335 = vpop.f32.mrf.mxu0
      %v1336 = vadd.f32 0.0, %v1335
      %1337 = vdwg.mxu0
      %v1338 = vadd.f32 %v1201, %v1278
      %v1339 = vadd.f32 %v1202, %v1304
      %v1340 = vadd.f32 %v1203, %v1330
      %v1341 = vadd.f32 %v1204, %v1281
      %v1342 = vadd.f32 %v1205, %v1307
      %v1343 = vadd.f32 %v1206, %v1333
      %v1344 = vadd.f32 %v1207, %v1284
      %v1345 = vadd.f32 %v1208, %v1310
      %v1346 = vadd.f32 %v1209, %v1336
      %1347 = vst [vmem:[%s143] sm:$0xff] %v1338
      %1348 = vst [vmem:[%s143 + $0x8] sm:$0xff] %v1339
      %vm1349 = vcmask 261120
      %1350 = vst.msk [vmem:[%s143 + $0x10] sm:$0xff] %vm1349, %v1340
      %1351 = vst [vmem:[%s143 + $0x18] sm:$0xff] %v1341
      %1352 = vst [vmem:[%s143 + $0x20] sm:$0xff] %v1342
      %1353 = vst.msk [vmem:[%s143 + $0x28] sm:$0xff] %vm1349, %v1343
      %1354 = vst [vmem:[%s143 + $0x30] sm:$0xf] %v1344
      %1355 = vst [vmem:[%s143 + $0x38] sm:$0xf] %v1345
      %vm1356 = vcmask 257024
      %1357 = vst.msk [vmem:[%s143 + $0x40] sm:$0xf] %vm1356, %v1346
      %p1358 = scmp.lt.s32.totalorder %s13, 1
      %s1359 = scalar_select %p1358, %s13, 1
      %s1360 = smul.addr %s1359, 9
      %s1361 = smul.addr %s1360, 8
      %s1362 = scalar_lea.vmem %s2, %s1361
      // Predicated region
      $region29: #{tpu_custom_call.1} parent=27 // pred_check
        %p1363 = pneg %p78
      $region30: #{tpu_custom_call.1} parent=27 // pred_check_branch
        %1365 = sbr.rel (%p1363) target = $region32
      $region31: #{tpu_custom_call.1} parent=27 // pred_region
        _
      $region32: #{tpu_custom_call.1} parent=27 // pred_fallthru
        _
    $region28: #{tpu_custom_call.1} parent=5 // pred_fallthru
      _
    %p1366 = scmp.le.s32.totalorder 2, %s8
    // Predicated region
    $region33: #{tpu_custom_call.1} parent=5 // pred_check
      %p1367 = pneg %p1366
    $region34: #{tpu_custom_call.1} parent=5 // pred_check_branch
      %1369 = sbr.rel (%p1367) target = $region36
    $region35: #{tpu_custom_call.1} parent=5 // pred_region
      %s1370 = ssub.s32 %s8, 2
      // Predicated region
      $region37: #{tpu_custom_call.1} parent=35 // pred_check
        %p1371 = pneg %p84
      $region38: #{tpu_custom_call.1} parent=35 // pred_check_branch
        %1373 = sbr.rel (%p1371) target = $region40
      $region39: #{tpu_custom_call.1} parent=35 // pred_region
        %p1374 = scmp.lt.s32.totalorder %s14, 1
        %s1375 = scalar_select %p1374, %s14, 1
        %s1376 = smul.addr %s1375, 9
        %s1377 = smul.addr %s1376, 8
        %s1378 = scalar_lea.vmem %s2, %s1377
      $region40: #{tpu_custom_call.1} parent=35 // pred_fallthru
        _
    $region36: #{tpu_custom_call.1} parent=5 // pred_fallthru
      _
  $region6: #{tpu_custom_call.1} parent=0 // loop_footer
    %s12 = sadd.s32 1, %s8
  $region7: #{tpu_custom_call.1} parent=0 // loop_footer_branch
    %7 = sbr.rel target = $region3
  $region8: #{tpu_custom_call.1} parent=0 // loop_exit
    _

</llo_original>
